<compile_context>
chip_gen: v5e
topology: v5e:2x2
jax: 0.10.0
libtpu: 0.0.40
codegen_flags: <defaults>
</compile_context>

<pallas_src>
import math
from functools import lru_cache, partial

import jax
import jax.numpy as jnp
from jax import lax
from jax.experimental import pallas as pl
from jax.experimental.pallas import tpu as pltpu


@lru_cache(maxsize=None)
def _target_block_bytes():
    """Per-block f32 compute-footprint target.

    v5e/v6e (0.8-1.4 TB/s HBM, 128 MiB VMEM): ~2 MiB tiles already sit at
    ~85% of the HBM roofline; bigger tiles only add VMEM pressure.
    v7x-class (3.2 TB/s HBM, 64 MiB VMEM): a 2 MiB block streams in <1 us so
    the ~0.35 us per-grid-step overhead is relatively expensive -> 4 MiB.
    """
    try:
        info = pltpu.get_tpu_info()
        vmem = int(getattr(info, "vmem_capacity_bytes", 128 << 20))
        if vmem <= (64 << 20):
            return 4 << 20
    except Exception:
        pass
    return 2 << 20


def _vmem_limit(block_elems, itemsize):
    # Live set ~= double-buffered in + double-buffered out + f32 temporaries.
    live = block_elems * (2 * itemsize + 2 * itemsize + 2 * 4)
    # 2x headroom, clamped to stay well under v7x's 64 MiB physical VMEM.
    return int(min(max(2 * live, 16 << 20), 40 << 20))


def _pick_tile(total, unit, max_elems):
    """Tile size along one axis (a multiple of `unit`, or the full axis).

    Prefers the full axis when it fits; otherwise the largest exact divisor of
    `total` that is still >= ~half the budget (so awkward extents like
    128*prime don't degenerate to tiny 128-wide tiles); otherwise a full-size
    tile with a Pallas-masked ragged tail block.

    NOTE: the masked-tail fallback is only correct because the reduction axis
    (C) is never tiled — every output element depends only on its own column.
    """
    if total <= max_elems:
        return total, 1
    cap = max(unit, (max_elems // unit) * unit)
    floor = max(unit, (cap // 2 // unit) * unit)
    t = cap
    while t >= floor:
        if total % t == 0:
            return t, total // t
        t -= unit
    return cap, pl.cdiv(total, cap)


def _split_single_block(total, unit):
    """Split a full-extent axis into ~two tiles (second may be a masked tail).

    v7x has 2 TensorCores and 'parallel' grid axes are sharded across them; a
    1-step grid would leave one core idle. Costs one extra ~0.35 us step on
    single-core chips — negligible for the block sizes where we apply it.
    """
    half = ((total + 1) // 2 + unit - 1) // unit * unit
    return half, pl.cdiv(total, half)


# ---------------------------------------------------------------------------
# Kernel body (shared): normalize over `axis`, scale by sqrt(C).
# ---------------------------------------------------------------------------
def _pixelnorm_kernel(x_ref, o_ref, *, axis, eps, scale):
    x = x_ref[...].astype(jnp.float32)
    sumsq = jnp.sum(x * x, axis=axis, keepdims=True)
    # scale * rsqrt(max(sumsq, eps^2)) == scale / max(norm, eps)  (EUP slot).
    inv = scale * lax.rsqrt(jnp.maximum(sumsq, eps * eps))
    o_ref[...] = (x * inv).astype(o_ref.dtype)


# ---------------------------------------------------------------------------
# Path A: normalized dim is not last, trail % 128 == 0 (NCHW hot path).
# Layout (lead, C, S, 128); block (1, C, TILE_S, 128); reduce over axis=1.
# ---------------------------------------------------------------------------
def _pixelnorm_channel4d(x4, eps):
    lead, c, s, lanes = x4.shape
    scale = math.sqrt(c)
    row_bytes = c * lanes * 4                      # f32 footprint per unit of S
    max_s = max(8, _target_block_bytes() // row_bytes)
    tile_s, ns = _pick_tile(s, 8, max_s)
    if lead * ns == 1 and s >= 16 and tile_s * row_bytes >= (512 << 10):
        tile_s, ns = _split_single_block(s, 8)
    block_elems = c * tile_s * lanes

    return pl.pallas_call(
        partial(_pixelnorm_kernel, axis=1, eps=float(eps), scale=float(scale)),
        out_shape=jax.ShapeDtypeStruct(x4.shape, x4.dtype),
        grid_spec=pltpu.PrefetchScalarGridSpec(
            num_scalar_prefetch=0,
            grid=(lead, ns),
            in_specs=[pl.BlockSpec((1, c, tile_s, lanes),
                                   lambda b, i: (b, 0, i, 0))],
            out_specs=pl.BlockSpec((1, c, tile_s, lanes),
                                   lambda b, i: (b, 0, i, 0)),
        ),
        compiler_params=pltpu.CompilerParams(
            dimension_semantics=("parallel", "parallel"),
            vmem_limit_bytes=_vmem_limit(block_elems, x4.dtype.itemsize)),
    )(x4)


# ---------------------------------------------------------------------------
# Path B: normalized dim not last, trail not a multiple of 128 (fallback).
# Layout (lead, C, T); block (1, C, TILE_T); C on sublanes, T lane-dense.
# ---------------------------------------------------------------------------
def _pixelnorm_channel3d(x3, eps):
    lead, c, t = x3.shape
    scale = math.sqrt(c)
    col_bytes = c * 4
    max_t = max(128, _target_block_bytes() // col_bytes)
    tile_t, nt = _pick_tile(t, 128, max_t)
    if lead * nt == 1 and t >= 256 and tile_t * col_bytes >= (512 << 10):
        tile_t, nt = _split_single_block(t, 128)
    block_elems = c * tile_t

    return pl.pallas_call(
        partial(_pixelnorm_kernel, axis=1, eps=float(eps), scale=float(scale)),
        out_shape=jax.ShapeDtypeStruct(x3.shape, x3.dtype),
        grid_spec=pltpu.PrefetchScalarGridSpec(
            num_scalar_prefetch=0,
            grid=(lead, nt),
            in_specs=[pl.BlockSpec((1, c, tile_t), lambda b, i: (b, 0, i))],
            out_specs=pl.BlockSpec((1, c, tile_t), lambda b, i: (b, 0, i)),
        ),
        compiler_params=pltpu.CompilerParams(
            dimension_semantics=("parallel", "parallel"),
            vmem_limit_bytes=_vmem_limit(block_elems, x3.dtype.itemsize)),
    )(x3)


# ---------------------------------------------------------------------------
# Path C: normalized dim is (effectively) last. Layout (rows, C); reduce lanes.
# TODO(synk): if this path ever becomes hot with C < 128, pack 128//C rows per
# lane row (segmented reduce) to avoid masked vst.msk partial stores.
# ---------------------------------------------------------------------------
def _pixelnorm_rows(x2, eps):
    rows, c = x2.shape
    scale = math.sqrt(c)
    row_bytes = c * 4
    max_r = max(8, _target_block_bytes() // row_bytes)
    tile_r, nr = _pick_tile(rows, 8, max_r)
    if nr == 1 and rows >= 16 and tile_r * row_bytes >= (512 << 10):
        tile_r, nr = _split_single_block(rows, 8)
    block_elems = c * tile_r

    return pl.pallas_call(
        partial(_pixelnorm_kernel, axis=-1, eps=float(eps), scale=float(scale)),
        out_shape=jax.ShapeDtypeStruct(x2.shape, x2.dtype),
        grid_spec=pltpu.PrefetchScalarGridSpec(
            num_scalar_prefetch=0,
            grid=(nr,),
            in_specs=[pl.BlockSpec((tile_r, c), lambda i: (i, 0))],
            out_specs=pl.BlockSpec((tile_r, c), lambda i: (i, 0)),
        ),
        compiler_params=pltpu.CompilerParams(
            dimension_semantics=("parallel",),
            vmem_limit_bytes=_vmem_limit(block_elems, x2.dtype.itemsize)),
    )(x2)


class PixelNorm:
    """JAX/Pallas port of the PyTorch PixelNorm module (no parameters)."""

    def __init__(self, dim, eps=1e-4):
        self.dim = dim
        self.eps = float(eps)

    def __call__(self, x):
        dim = self.dim % x.ndim
        shape = x.shape
        c = shape[dim]
        lead = math.prod(shape[:dim])
        trail = math.prod(shape[dim + 1:])
        if trail == 1:
            out = _pixelnorm_rows(x.reshape(lead, c), self.eps)
        elif trail % 128 == 0:
            out = _pixelnorm_channel4d(
                x.reshape(lead, c, trail // 128, 128), self.eps)
        else:
            out = _pixelnorm_channel3d(x.reshape(lead, c, trail), self.eps)
        return out.reshape(shape)


def _reference(x, dim, eps):
    # Pure-JAX mirror of F.normalize(x, dim, eps) * sqrt(C).
    norm = jnp.sqrt(jnp.sum(x.astype(jnp.float32) ** 2, axis=dim, keepdims=True))
    denom = jnp.maximum(norm, eps)
    return (x / denom * math.sqrt(x.shape[dim])).astype(x.dtype)


if __name__ == "__main__":
    # NCHW input, normalize over channel dim (dim=1), as in the autoencoder.
    x = jax.random.normal(jax.random.PRNGKey(0), (2, 4, 16, 16), dtype=jnp.float32)
    mod = PixelNorm(dim=1, eps=1e-4)
    y = jax.block_until_ready(mod(x))
    y_ref = _reference(x, dim=1, eps=1e-4)
    assert y.shape == x.shape and y.dtype == x.dtype
    assert jnp.allclose(y, y_ref, atol=1e-5, rtol=1e-5), "channel-4D path mismatch"

    # Last-dim path (e.g. normalizing a hidden dim).
    x2 = jax.random.normal(jax.random.PRNGKey(1), (8, 32), dtype=jnp.float32)
    y2 = jax.block_until_ready(PixelNorm(dim=-1, eps=1e-4)(x2))
    assert jnp.allclose(y2, _reference(x2, dim=-1, eps=1e-4),
                        atol=1e-5, rtol=1e-5), "rows path mismatch"

    # Odd-spatial fallback (trail not a multiple of 128 -> 3D channel path).
    x3 = jax.random.normal(jax.random.PRNGKey(2), (2, 4, 5, 5), dtype=jnp.float32)
    y3 = jax.block_until_ready(PixelNorm(dim=1, eps=1e-4)(x3))
    assert jnp.allclose(y3, _reference(x3, dim=1, eps=1e-4),
                        atol=1e-5, rtol=1e-5), "channel-3D path mismatch"

    print("KERNEL_OK")
</pallas_src>

<mosaic_0001>
module attributes {stable_mosaic.version = 11 : i64} {
  func.func @_pixelnorm_kernel(%arg0: i32, %arg1: i32, %arg2: memref<1x4x2x128xf32, #tpu.memory_space<vmem>>, %arg3: memref<1x4x2x128xf32, #tpu.memory_space<vmem>>) attributes {dimension_semantics = [#tpu.dimension_semantics<parallel>, #tpu.dimension_semantics<parallel>], iteration_bounds = array<i64: 2, 1>, scalar_prefetch = 0 : i64, scratch_operands = 0 : i64, tpu.core_type = #tpu.core_type<tc>, window_params = [{transform_indices = @transform_0, window_bounds = array<i64: 1, 4, 2, 128>}, {transform_indices = @transform_1, window_bounds = array<i64: 1, 4, 2, 128>}]} {
    %c0 = arith.constant 0 : index
    %c0_0 = arith.constant 0 : index
    %c0_1 = arith.constant 0 : index
    %c0_2 = arith.constant 0 : index
    %0 = vector.load %arg2[%c0, %c0_0, %c0_1, %c0_2] : memref<1x4x2x128xf32, #tpu.memory_space<vmem>>, vector<1x4x2x128xf32>
    %1 = arith.mulf %0, %0 : vector<1x4x2x128xf32>
    %cst = arith.constant dense<0.000000e+00> : vector<1x2x128xf32>
    %2 = vector.multi_reduction <add>, %1, %cst [1] : vector<1x4x2x128xf32> to vector<1x2x128xf32>
    %3 = vector.shape_cast %2 : vector<1x2x128xf32> to vector<1x1x2x128xf32>
    %cst_3 = arith.constant 9.99999993E-9 : f32
    %4 = vector.broadcast %cst_3 : f32 to vector<1x1x2x128xf32>
    %5 = arith.maximumf %3, %4 : vector<1x1x2x128xf32>
    %6 = math.rsqrt %5 : vector<1x1x2x128xf32>
    %cst_4 = arith.constant 2.000000e+00 : f32
    %7 = vector.broadcast %cst_4 : f32 to vector<1x1x2x128xf32>
    %8 = arith.mulf %7, %6 : vector<1x1x2x128xf32>
    %9 = vector.broadcast %8 : vector<1x1x2x128xf32> to vector<1x4x2x128xf32>
    %10 = arith.mulf %0, %9 : vector<1x4x2x128xf32>
    %c0_5 = arith.constant 0 : index
    %c0_6 = arith.constant 0 : index
    %c0_7 = arith.constant 0 : index
    %c0_8 = arith.constant 0 : index
    %11 = vector.load %arg3[%c0_5, %c0_6, %c0_7, %c0_8] : memref<1x4x2x128xf32, #tpu.memory_space<vmem>>, vector<1x4x2x128xf32>
    tpu.vector_store %arg3[%c0_5, %c0_6, %c0_7, %c0_8], %10 {strides = array<i32>} : memref<1x4x2x128xf32, #tpu.memory_space<vmem>>, vector<1x4x2x128xf32>,
    return
  }
  func.func @transform_0(%arg0: i32, %arg1: i32) -> (i32, i32, i32, i32) {
    %c0_i32 = arith.constant 0 : i32
    %c0_i32_0 = arith.constant 0 : i32
    %c0_i32_1 = arith.constant 0 : i32
    return %arg0, %c0_i32, %arg1, %c0_i32_0 : i32, i32, i32, i32
  }
  func.func @transform_1(%arg0: i32, %arg1: i32) -> (i32, i32, i32, i32) {
    %c0_i32 = arith.constant 0 : i32
    %c0_i32_0 = arith.constant 0 : i32
    %c0_i32_1 = arith.constant 0 : i32
    return %arg0, %c0_i32, %arg1, %c0_i32_0 : i32, i32, i32, i32
  }
}

</mosaic_0001>

<llo_original>
// kernel: tpu_custom_call.1
$region0: #{tpu_custom_call.1}
  #allocation0 [shape = 'u32[]', space=smem, size = 0x4, offset = 0x4, fixed_abs, tag = 'smem constant byte address 0x4 - core index']
  #allocation1 [shape = 'u32[72,128]{1,0:T(1,128)}', space=vmem, size = 0x9000, scoped, tag = 'internal scratch']
  %s0 = inlined_call_operand.hbm [shape: f32[2,4,2,128], index: 0, kind: input, shape index: {}]
  %s1 = inlined_call_operand.hbm [shape: f32[2,4,2,128], index: 1, kind: output, shape index: {}]
  %s2 = sld [smem:[#allocation0]]
  $region41: #{tpu_custom_call.1} parent=0
    _
  %s4 = ssub.s32 1, %s2
  %s5 = scalar_select 0, %s4, %s2
  $region1: #{tpu_custom_call.1} parent=0
    #allocation2 [shape = 'u8[8192]{0}', space=vmem, size = 0x2000, scoped, tag = 'input window, operand 0']
    #allocation3 [shape = 's32[2]{0}', space=sflag, size = 0x8, scoped, tag = 'scoped memory for tpu_custom_call.1']
    #allocation4 [shape = 's32[2]{0}', space=sflag, size = 0x8, scoped, tag = 'scoped memory for tpu_custom_call.1']
    #allocation5 [shape = 'u8[8192]{0}', space=vmem, size = 0x2000, scoped, tag = 'output window, operand 0']
    %6 = vsyncpa [#allocation3], 0
    %s7 = scalar_lea.sflag [#allocation3], 1
    %8 = vsyncpa %s7, 0
    %9 = vsyncpa [#allocation4], 0
    %s10 = scalar_lea.sflag [#allocation4], 1
    %11 = vsyncpa %s10, 0
    loop: start=0, step=1, limit=4
    $region2: #{tpu_custom_call.1} parent=1 // loop_pre_header
      _
    $region3: #{tpu_custom_call.1} parent=1 // loop_header
      %s13 = sphi 0, %s17
      %p14 = scmp.ge.s32.totalorder %s13, 4
      %s20 = sphi 0, %s32
      %s21 = sphi 0, %s28
      %s22 = sphi 0, %s20
      %s23 = sphi 0, %s21
      %s24 = sphi 0, %s22
      %s25 = sphi 0, %s23
      %s37 = sphi 0, %s39
      %s40 = sphi 0, %s37
      %s41 = sphi 0, %s40
      %s57 = sphi 0, %s41
      %s65 = sphi 0, %s67
      %s68 = sphi 0, %s65
      %s69 = sphi 0, %s68
      %s85 = sphi 0, %s69
    $region4: #{tpu_custom_call.1} parent=1 // loop_header_branch
      %16 = sbr.rel (%p14) target = $region8
    $region5: #{tpu_custom_call.1} parent=1 // loop_body
      %s18 = ssub.s32 %s13, 1
      %s19 = ssub.s32 %s13, 2
      %s26 = sadd.s32 1, %s21
      %p27 = scmp.ge.s32.totalorder %s26, 1
      %s28 = scalar_select %p27, 0, %s26
      %s29 = sadd.s32 1, %s20
      %s30 = scalar_select %p27, %s29, %s20
      %p31 = scmp.ge.s32.totalorder %s30, 2
      %s32 = scalar_select %p31, 0, %s30
      %s33 = ssub.s32 %s20, %s32
      %s34 = ssub.s32 %s21, %s28
      %s35 = sor.u32 %s33, %s34
      %p36 = scmp.eq.s32.totalorder %s35, 0
      %s38 = sadd.s32 %s37, 1
      %s39 = scalar_select %p36, %s37, %s38
      %p42 = pneg %p36
      %p43 = scmp.eq.s32.totalorder %s13, 1
      %p44 = por %p42, %p43
      %p45 = scmp.ne.s32.totalorder %s37, %s40
      %p46 = scmp.eq.s32.totalorder %s13, 0
      %p47 = por %p45, %p46
      %p48 = scmp.ne.s32.totalorder %s37, %s40
      %p49 = scmp.eq.s32.totalorder %s18, 1
      %p50 = por %p48, %p49
      %p51 = scmp.ne.s32.totalorder %s40, %s41
      %p52 = scmp.eq.s32.totalorder %s18, 0
      %p53 = por %p51, %p52
      %p54 = scmp.ne.s32.totalorder %s40, %s41
      %p55 = scmp.eq.s32.totalorder %s19, 1
      %p56 = por %p54, %p55
      %p58 = scmp.ne.s32.totalorder %s41, %s57
      %p59 = scmp.eq.s32.totalorder %s19, 0
      %p60 = por %p58, %p59
      %s61 = ssub.s32 %s20, %s32
      %s62 = ssub.s32 %s21, %s28
      %s63 = sor.u32 %s61, %s62
      %p64 = scmp.eq.s32.totalorder %s63, 0
      %s66 = sadd.s32 %s65, 1
      %s67 = scalar_select %p64, %s65, %s66
      %p70 = pneg %p64
      %p71 = scmp.eq.s32.totalorder %s13, 1
      %p72 = por %p70, %p71
      %p73 = scmp.ne.s32.totalorder %s65, %s68
      %p74 = scmp.eq.s32.totalorder %s13, 0
      %p75 = por %p73, %p74
      %p76 = scmp.ne.s32.totalorder %s65, %s68
      %p77 = scmp.eq.s32.totalorder %s18, 1
      %p78 = por %p76, %p77
      %p79 = scmp.ne.s32.totalorder %s68, %s69
      %p80 = scmp.eq.s32.totalorder %s18, 0
      %p81 = por %p79, %p80
      %p82 = scmp.ne.s32.totalorder %s68, %s69
      %p83 = scmp.eq.s32.totalorder %s19, 1
      %p84 = por %p82, %p83
      %p86 = scmp.ne.s32.totalorder %s69, %s85
      %p87 = scmp.eq.s32.totalorder %s19, 0
      %p88 = por %p86, %p87
      %p89 = scmp.le.s32.totalorder 1, %s13
      %p90 = scmp.lt.s32.totalorder %s13, 3
      %p91 = pnand %p89, %p90
      %p92 = pneg %p91
      // Predicated region
      $region9: #{tpu_custom_call.1} parent=5 // pred_check
        _
      $region10: #{tpu_custom_call.1} parent=5 // pred_check_branch
        %94 = sbr.rel (%p91) target = $region12
      $region11: #{tpu_custom_call.1} parent=5 // pred_region
        %s95 = ssub.s32 %s13, 1
      $region12: #{tpu_custom_call.1} parent=5 // pred_fallthru
        _
      %p96 = scmp.lt.s32.totalorder %s13, 2
      // Predicated region
      $region13: #{tpu_custom_call.1} parent=5 // pred_check
        %p97 = pneg %p96
      $region14: #{tpu_custom_call.1} parent=5 // pred_check_branch
        %99 = sbr.rel (%p97) target = $region16
      $region15: #{tpu_custom_call.1} parent=5 // pred_region
        // Predicated region
        $region17: #{tpu_custom_call.1} parent=15 // pred_check
          %p100 = pneg %p47
        $region18: #{tpu_custom_call.1} parent=15 // pred_check_branch
          %102 = sbr.rel (%p100) target = $region20
        $region19: #{tpu_custom_call.1} parent=15 // pred_region
          %s103 = sand.u32 %s37, 1
          %s104 = scalar_lea.sflag [#allocation3], %s103
          %s105 = sand.u32 %s37, 1
          %s106 = smul.addr %s105, 8
          %s107 = scalar_lea.vmem [#allocation2], %s106
          %109 = vsyncadd %s104, 0
          %s110 = smul.addr %s20, 4
          %s111 = sadd.s32 %s21, %s110
          %s112 = smul.addr %s111, 2
          %s113 = scalar_lea.hbm %s0, %s112
          %s114 = sshll.u32 %s113, 4
          %s115 = int_to_ptr.hbm [resolvable:$true] %s114
          %s116 = sshll.u32 %s107, 4
          %s117 = int_to_ptr.vmem [resolvable:$true] %s116
          %122 = dma.hbm_to_vmem [thread:$0]  %s115, 128, %s117, %s104, 32, 32, 2
        $region20: #{tpu_custom_call.1} parent=15 // pred_fallthru
          _
      $region16: #{tpu_custom_call.1} parent=5 // pred_fallthru
        _
      %p123 = scmp.le.s32.totalorder 1, %s13
      %p124 = scmp.lt.s32.totalorder %s13, 3
      %p125 = pnand %p123, %p124
      %p126 = pneg %p125
      // Predicated region
      $region21: #{tpu_custom_call.1} parent=5 // pred_check
        _
      $region22: #{tpu_custom_call.1} parent=5 // pred_check_branch
        %128 = sbr.rel (%p125) target = $region24
      $region23: #{tpu_custom_call.1} parent=5 // pred_region
        %s129 = ssub.s32 %s13, 1
        %s130 = sand.u32 %s40, 1
        %s131 = scalar_lea.sflag [#allocation3], %s130
        %s132 = sand.u32 %s40, 1
        %s133 = smul.addr %s132, 8
        %s134 = scalar_lea.vmem [#allocation2], %s133
        // Predicated region
        $region25: #{tpu_custom_call.1} parent=23 // pred_check
          %p135 = pneg %p53
        $region26: #{tpu_custom_call.1} parent=23 // pred_check_branch
          %137 = sbr.rel (%p135) target = $region28
        $region27: #{tpu_custom_call.1} parent=23 // pred_region
          %139 = dma.done %s131, 128
        $region28: #{tpu_custom_call.1} parent=23 // pred_fallthru
          _
        %s140 = sand.u32 %s40, 1
        %s141 = scalar_lea.sflag [#allocation3], %s140
        %s142 = sand.u32 %s40, 1
        %s143 = smul.addr %s142, 8
        %s144 = scalar_lea.vmem [#allocation2], %s143
        %p145 = pneg %p53
        %p146 = pneg %p50
        %p147 = pneg %p81
        %p148 = pneg %p78
        %s149 = sand.u32 %s68, 1
        %s150 = scalar_lea.sflag [#allocation4], %s149
        %s151 = sand.u32 %s68, 1
        %s152 = smul.addr %s151, 8
        %s153 = scalar_lea.vmem [#allocation5], %s152
        %v154 = vld [vmem:[%s134] sm:$0x3]
        %v155 = vld [vmem:[%s134 + $0x2] sm:$0x3]
        %v156 = vld [vmem:[%s134 + $0x4] sm:$0x3]
        %v157 = vld [vmem:[%s134 + $0x6] sm:$0x3]
        %v158 = vmul.f32 %v154, %v154
        %v159 = vmul.f32 %v155, %v155
        %v160 = vmul.f32 %v156, %v156
        %v161 = vmul.f32 %v157, %v157
        %vm162 = vcmask 1041408
        %v163 = vsel %vm162, %v158, 0.0
        %v164 = vsel %vm162, %v159, 0.0
        %v165 = vadd.f32 %v163, %v164
        %v166 = vsel %vm162, %v160, 0.0
        %v167 = vadd.f32 %v165, %v166
        %v168 = vsel %vm162, %v161, 0.0
        %v169 = vadd.f32 %v167, %v168
        %v170 = vmax.f32 %v169, 1e-08
        %v171 = vrsqrt.pop %v170
        %v172 = vmul.f32 %v171, %v170
        %v173 = vmul.f32 %v172, %v171
        %v174 = vmul.f32 0.5, %v173
        %v175 = vsub.f32 1.5, %v174
        %v176 = vmul.f32 %v171, %v175
        %vm177 = vweird.f32 %v170
        %vm178 = vweird.f32 %v171
        %vm179 = vmor %vm177, %vm178
        %v180 = vsel %vm179, %v171, %v176
        %v181 = vmul.f32 %v180, 2.0
        %v182 = vmul.f32 %v154, %v181
        %v183 = vmul.f32 %v155, %v181
        %v184 = vmul.f32 %v156, %v181
        %v185 = vmul.f32 %v157, %v181
        %186 = vst [vmem:[%s153] sm:$0x3] %v182
        %187 = vst [vmem:[%s153 + $0x2] sm:$0x3] %v183
        %188 = vst [vmem:[%s153 + $0x4] sm:$0x3] %v184
        %189 = vst [vmem:[%s153 + $0x6] sm:$0x3] %v185
        %s190 = sand.u32 %s68, 1
        %s191 = scalar_lea.sflag [#allocation4], %s190
        %s192 = sand.u32 %s68, 1
        %s193 = smul.addr %s192, 8
        %s194 = scalar_lea.vmem [#allocation5], %s193
        // Predicated region
        $region29: #{tpu_custom_call.1} parent=23 // pred_check
          %p195 = pneg %p78
        $region30: #{tpu_custom_call.1} parent=23 // pred_check_branch
          %197 = sbr.rel (%p195) target = $region32
        $region31: #{tpu_custom_call.1} parent=23 // pred_region
          %199 = vsyncadd %s191, 0
          %s200 = smul.addr %s22, 4
          %s201 = sadd.s32 %s23, %s200
          %s202 = smul.addr %s201, 2
          %s203 = scalar_lea.hbm %s1, %s202
          %s204 = sshll.u32 %s194, 4
          %s205 = int_to_ptr.vmem [resolvable:$true] %s204
          %s206 = sshll.u32 %s203, 4
          %s207 = int_to_ptr.hbm [resolvable:$true] %s206
          %212 = dma.vmem_to_hbm [thread:$0]  %s205, 128, %s207, %s191, 32, 32, 2
        $region32: #{tpu_custom_call.1} parent=23 // pred_fallthru
          _
      $region24: #{tpu_custom_call.1} parent=5 // pred_fallthru
        _
      %p213 = scmp.le.s32.totalorder 2, %s13
      // Predicated region
      $region33: #{tpu_custom_call.1} parent=5 // pred_check
        %p214 = pneg %p213
      $region34: #{tpu_custom_call.1} parent=5 // pred_check_branch
        %216 = sbr.rel (%p214) target = $region36
      $region35: #{tpu_custom_call.1} parent=5 // pred_region
        %s217 = ssub.s32 %s13, 2
        // Predicated region
        $region37: #{tpu_custom_call.1} parent=35 // pred_check
          %p218 = pneg %p84
        $region38: #{tpu_custom_call.1} parent=35 // pred_check_branch
          %220 = sbr.rel (%p218) target = $region40
        $region39: #{tpu_custom_call.1} parent=35 // pred_region
          %s221 = sand.u32 %s69, 1
          %s222 = scalar_lea.sflag [#allocation4], %s221
          %s223 = sand.u32 %s69, 1
          %s224 = smul.addr %s223, 8
          %s225 = scalar_lea.vmem [#allocation5], %s224
          %227 = dma.done %s222, 128
        $region40: #{tpu_custom_call.1} parent=35 // pred_fallthru
          _
      $region36: #{tpu_custom_call.1} parent=5 // pred_fallthru
        _
    $region6: #{tpu_custom_call.1} parent=1 // loop_footer
      %s17 = sadd.s32 1, %s13
    $region7: #{tpu_custom_call.1} parent=1 // loop_footer_branch
      %12 = sbr.rel target = $region3
    $region8: #{tpu_custom_call.1} parent=1 // loop_exit
      _
    %228 = vsyncpa [#allocation3], 1
    %s229 = scalar_lea.sflag [#allocation3], 1
    %230 = vsyncpa %s229, 1
    %231 = vsyncpa [#allocation4], 1
    %s232 = scalar_lea.sflag [#allocation4], 1
    %233 = vsyncpa %s232, 1

</llo_original>
